<compile_context>
chip_gen: v6e
topology: v6e:2x2x1
jax: 0.10.0
libtpu: 0.0.40
codegen_flags: <defaults>
</compile_context>

<pallas_src>
import jax
import jax.numpy as jnp
from jax.experimental import pallas as pl
from jax.experimental.pallas import tpu as pltpu


_LANES = 128


def _round_up(d, m=_LANES):
    return ((d + m - 1) // m) * m


def _pad_axis(a, target, axis):
    pad = target - a.shape[axis]
    if pad <= 0:
        return a
    widths = [(0, 0)] * a.ndim
    widths[axis] = (0, pad)
    return jnp.pad(a, widths)


def two_layer_gcn_kernel(a_ref, x_ref, w1_ref, gb1_ref, w2_ref, gb2_ref,
                         alpha_ref, o_ref):
    eps = 1e-5
    a_hat = a_ref[...]                                     # bf16 [N, N]

    # ----- Layer 1: GCNConv (aggregate-then-transform) -> BN (batch stats) -> PReLU -----
    ax = jnp.dot(a_hat, x_ref[...], preferred_element_type=jnp.float32)       # [N, Fin]
    h = jnp.dot(ax.astype(jnp.bfloat16), w1_ref[...],
                preferred_element_type=jnp.float32)                           # [N, H]
    mu1 = jnp.mean(h, axis=0, keepdims=True)
    var1 = jnp.mean(h * h, axis=0, keepdims=True) - mu1 * mu1                 # E[h^2]-mu^2
    gb1 = gb1_ref[...]
    h = (h - mu1) * jax.lax.rsqrt(var1 + eps) * gb1[0:1, :] + gb1[1:2, :]
    a1 = alpha_ref[0]
    h = jnp.where(h >= 0.0, h, a1 * h)                                        # PReLU

    # ----- Layer 2: GCNConv (transform-then-aggregate) -> BN (batch stats) -> PReLU -----
    hw = jnp.dot(h.astype(jnp.bfloat16), w2_ref[...],
                 preferred_element_type=jnp.float32)                          # [N, Fout]
    z = jnp.dot(a_hat, hw.astype(jnp.bfloat16),
                preferred_element_type=jnp.float32)                           # [N, Fout]
    mu2 = jnp.mean(z, axis=0, keepdims=True)
    var2 = jnp.mean(z * z, axis=0, keepdims=True) - mu2 * mu2
    gb2 = gb2_ref[...]
    z = (z - mu2) * jax.lax.rsqrt(var2 + eps) * gb2[0:1, :] + gb2[1:2, :]
    a2 = alpha_ref[1]
    z = jnp.where(z >= 0.0, z, a2 * z)                                        # PReLU

    o_ref[...] = z.astype(o_ref.dtype)


def two_layer_gcn(a_hat, x, params):
    """Fused forward pass; whole (small) graph lives in VMEM so the global BatchNorm
    reduction over nodes happens in a single block."""
    n, in_dim = x.shape
    hidden_dim = params["w1"].shape[1]
    out_dim = params["w2"].shape[1]
    in_pad, hid_pad, out_pad = map(_round_up, (in_dim, hidden_dim, out_dim))

    # bf16 MXU operands; lane-pad feature dims to 128 (padded lanes stay exactly zero).
    a_b = a_hat.astype(jnp.bfloat16)
    x_p = _pad_axis(x, in_pad, 1).astype(jnp.bfloat16)
    w1_p = _pad_axis(_pad_axis(params["w1"], in_pad, 0), hid_pad, 1).astype(jnp.bfloat16)
    w2_p = _pad_axis(_pad_axis(params["w2"], hid_pad, 0), out_pad, 1).astype(jnp.bfloat16)
    # gamma/beta packed into a single (2, F_pad) operand per layer.
    gb1 = _pad_axis(jnp.concatenate([params["g1"], params["be1"]], axis=0), hid_pad, 1)
    gb2 = _pad_axis(jnp.concatenate([params["g2"], params["be2"]], axis=0), out_pad, 1)
    # Both PReLU alphas as one tiny SMEM scalar array.
    alphas = jnp.concatenate([params["a1"].reshape(1), params["a2"].reshape(1)])

    vmem = pl.BlockSpec(memory_space=pltpu.MemorySpace.VMEM)
    smem = pl.BlockSpec(memory_space=pltpu.MemorySpace.SMEM)

    operand_bytes = (a_b.size * 2 + x_p.size * 2 + w1_p.size * 2 + w2_p.size * 2
                     + gb1.size * 4 + gb2.size * 4 + n * out_pad * 4)
    interm_bytes = 4 * n * max(in_pad, hid_pad, out_pad) * 4
    vmem_limit = int(min(2 * (operand_bytes + interm_bytes) + (8 << 20), 96 << 20))

    out_p = pl.pallas_call(
        two_layer_gcn_kernel,
        out_shape=jax.ShapeDtypeStruct((n, out_pad), jnp.float32),
        in_specs=[vmem, vmem, vmem, vmem, vmem, vmem, smem],
        out_specs=vmem,
        compiler_params=pltpu.CompilerParams(vmem_limit_bytes=vmem_limit),
    )(a_b, x_p, w1_p, gb1, w2_p, gb2, alphas)

    return out_p[:, :out_dim]


# ---------------------------- plain-JAX glue ----------------------------

def gcn_norm_dense(edge_index, num_nodes):
    """Dense D^-1/2 (A + I) D^-1/2 like torch_geometric's gcn_norm.
    (Matches PyG for clean, duplicate-free, loop-free edge lists, as built below.)"""
    src, dst = edge_index
    a = jnp.zeros((num_nodes, num_nodes), jnp.float32)
    a = a.at[dst, src].add(1.0)                     # aggregate messages j->i at node i
    a = a + jnp.eye(num_nodes, dtype=jnp.float32)   # self-loops
    deg = jnp.sum(a, axis=1)
    dinv = jnp.where(deg > 0, 1.0 / jnp.sqrt(deg), 0.0)
    return dinv[:, None] * a * dinv[None, :]


def init_params(key, in_dim, hidden_dim, out_dim):
    k1, k2 = jax.random.split(key, 2)

    def glorot(k, fan_in, fan_out):
        lim = jnp.sqrt(6.0 / (fan_in + fan_out))
        return jax.random.uniform(k, (fan_in, fan_out), jnp.float32, -lim, lim)

    # GCNConv biases are omitted: zero-init in PyG and exactly cancelled by the
    # training-mode BatchNorm mean subtraction anyway.
    return {
        "w1": glorot(k1, in_dim, hidden_dim),
        "g1": jnp.ones((1, hidden_dim), jnp.float32),    # BatchNorm1d weight
        "be1": jnp.zeros((1, hidden_dim), jnp.float32),  # BatchNorm1d bias
        "a1": jnp.full((1, 1), 0.25, jnp.float32),       # PReLU (single param)
        "w2": glorot(k2, hidden_dim, out_dim),
        "g2": jnp.ones((1, out_dim), jnp.float32),
        "be2": jnp.zeros((1, out_dim), jnp.float32),
        "a2": jnp.full((1, 1), 0.25, jnp.float32),
    }


if __name__ == "__main__":
    N, IN_DIM, HIDDEN_DIM, OUT_DIM = 128, 16, 32, 16

    key = jax.random.PRNGKey(0)
    kx, kp = jax.random.split(key)

    # Node features
    x = jax.random.normal(kx, (N, IN_DIM), jnp.float32)

    # Deterministic bidirectional ring graph: edge_index shape (2, 2N)
    idx = jnp.arange(N)
    src = jnp.concatenate([idx, (idx + 1) % N])
    dst = jnp.concatenate([(idx + 1) % N, idx])
    edge_index = jnp.stack([src, dst])

    a_hat = gcn_norm_dense(edge_index, N)
    params = init_params(kp, IN_DIM, HIDDEN_DIM, OUT_DIM)

    out = two_layer_gcn(a_hat, x, params)
    jax.block_until_ready(out)
    assert out.shape == (N, OUT_DIM) and out.dtype == jnp.float32
    assert bool(jnp.all(jnp.isfinite(out)))
    print("KERNEL_OK")
</pallas_src>

<mosaic_0001>
module attributes {stable_mosaic.version = 11 : i64} {
  func.func @two_layer_gcn_kernel(%arg0: memref<128x128xbf16, #tpu.memory_space<vmem>>, %arg1: memref<128x128xbf16, #tpu.memory_space<vmem>>, %arg2: memref<128x128xbf16, #tpu.memory_space<vmem>>, %arg3: memref<2x128xf32, #tpu.memory_space<vmem>>, %arg4: memref<128x128xbf16, #tpu.memory_space<vmem>>, %arg5: memref<2x128xf32, #tpu.memory_space<vmem>>, %arg6: memref<2xf32, #tpu.memory_space<smem>>, %arg7: memref<128x128xf32, #tpu.memory_space<vmem>>) attributes {dimension_semantics = [], scalar_prefetch = 0 : i64, scratch_operands = 0 : i64, tpu.core_type = #tpu.core_type<tc>} {
    %c0 = arith.constant 0 : index
    %c0_0 = arith.constant 0 : index
    %0 = vector.load %arg0[%c0, %c0_0] : memref<128x128xbf16, #tpu.memory_space<vmem>>, vector<128x128xbf16>
    %c0_1 = arith.constant 0 : index
    %c0_2 = arith.constant 0 : index
    %1 = vector.load %arg1[%c0_1, %c0_2] : memref<128x128xbf16, #tpu.memory_space<vmem>>, vector<128x128xbf16>
    %cst = arith.constant dense<0.000000e+00> : vector<128x128xf32>
    %2 = tpu.matmul %0, %1, %cst {dimension_numbers = #tpu.dot_dimension_numbers<[1], [0], [0], [1], [0, 0, 1, 1], [], []>} : vector<128x128xbf16>, vector<128x128xbf16>, vector<128x128xf32> -> vector<128x128xf32>
    %3 = arith.truncf %2 : vector<128x128xf32> to vector<128x128xbf16>
    %c0_3 = arith.constant 0 : index
    %c0_4 = arith.constant 0 : index
    %4 = vector.load %arg2[%c0_3, %c0_4] : memref<128x128xbf16, #tpu.memory_space<vmem>>, vector<128x128xbf16>
    %cst_5 = arith.constant dense<0.000000e+00> : vector<128x128xf32>
    %5 = tpu.matmul %3, %4, %cst_5 {dimension_numbers = #tpu.dot_dimension_numbers<[1], [0], [0], [1], [0, 0, 1, 1], [], []>} : vector<128x128xbf16>, vector<128x128xbf16>, vector<128x128xf32> -> vector<128x128xf32>
    %cst_6 = arith.constant dense<0.000000e+00> : vector<128xf32>
    %6 = vector.multi_reduction <add>, %5, %cst_6 [0] : vector<128x128xf32> to vector<128xf32>
    %7 = vector.shape_cast %6 : vector<128xf32> to vector<1x128xf32>
    %cst_7 = arith.constant 1.280000e+02 : f32
    %8 = vector.broadcast %cst_7 : f32 to vector<1x128xf32>
    %9 = arith.divf %7, %8 : vector<1x128xf32>
    %10 = arith.mulf %5, %5 : vector<128x128xf32>
    %cst_8 = arith.constant dense<0.000000e+00> : vector<128xf32>
    %11 = vector.multi_reduction <add>, %10, %cst_8 [0] : vector<128x128xf32> to vector<128xf32>
    %12 = vector.shape_cast %11 : vector<128xf32> to vector<1x128xf32>
    %cst_9 = arith.constant 1.280000e+02 : f32
    %13 = vector.broadcast %cst_9 : f32 to vector<1x128xf32>
    %14 = arith.divf %12, %13 : vector<1x128xf32>
    %15 = arith.mulf %9, %9 : vector<1x128xf32>
    %16 = arith.subf %14, %15 : vector<1x128xf32>
    %c0_10 = arith.constant 0 : index
    %c0_11 = arith.constant 0 : index
    %17 = vector.load %arg3[%c0_10, %c0_11] : memref<2x128xf32, #tpu.memory_space<vmem>>, vector<2x128xf32>
    %18 = vector.broadcast %9 : vector<1x128xf32> to vector<128x128xf32>
    %19 = arith.subf %5, %18 : vector<128x128xf32>
    %cst_12 = arith.constant 9.99999974E-6 : f32
    %20 = vector.broadcast %cst_12 : f32 to vector<1x128xf32>
    %21 = arith.addf %16, %20 : vector<1x128xf32>
    %22 = math.rsqrt %21 : vector<1x128xf32>
    %23 = vector.broadcast %22 : vector<1x128xf32> to vector<128x128xf32>
    %24 = arith.mulf %19, %23 : vector<128x128xf32>
    %25 = vector.extract_strided_slice %17 {offsets = [0, 0], sizes = [1, 128], strides = [1, 1]} : vector<2x128xf32> to vector<1x128xf32>
    %26 = vector.broadcast %25 : vector<1x128xf32> to vector<128x128xf32>
    %27 = arith.mulf %24, %26 : vector<128x128xf32>
    %28 = vector.extract_strided_slice %17 {offsets = [1, 0], sizes = [1, 128], strides = [1, 1]} : vector<2x128xf32> to vector<1x128xf32>
    %29 = vector.broadcast %28 : vector<1x128xf32> to vector<128x128xf32>
    %30 = arith.addf %27, %29 : vector<128x128xf32>
    %c0_13 = arith.constant 0 : index
    %31 = memref.load %arg6[%c0_13] : memref<2xf32, #tpu.memory_space<smem>>
    %cst_14 = arith.constant 0.000000e+00 : f32
    %32 = vector.broadcast %cst_14 : f32 to vector<128x128xf32>
    %33 = arith.cmpf oge, %30, %32 : vector<128x128xf32>
    %34 = vector.broadcast %31 : f32 to vector<128x128xf32>
    %35 = arith.mulf %34, %30 : vector<128x128xf32>
    %36 = arith.select %33, %30, %35 : vector<128x128xi1>, vector<128x128xf32>
    %37 = arith.truncf %36 : vector<128x128xf32> to vector<128x128xbf16>
    %c0_15 = arith.constant 0 : index
    %c0_16 = arith.constant 0 : index
    %38 = vector.load %arg4[%c0_15, %c0_16] : memref<128x128xbf16, #tpu.memory_space<vmem>>, vector<128x128xbf16>
    %cst_17 = arith.constant dense<0.000000e+00> : vector<128x128xf32>
    %39 = tpu.matmul %37, %38, %cst_17 {dimension_numbers = #tpu.dot_dimension_numbers<[1], [0], [0], [1], [0, 0, 1, 1], [], []>} : vector<128x128xbf16>, vector<128x128xbf16>, vector<128x128xf32> -> vector<128x128xf32>
    %40 = arith.truncf %39 : vector<128x128xf32> to vector<128x128xbf16>
    %cst_18 = arith.constant dense<0.000000e+00> : vector<128x128xf32>
    %41 = tpu.matmul %0, %40, %cst_18 {dimension_numbers = #tpu.dot_dimension_numbers<[1], [0], [0], [1], [0, 0, 1, 1], [], []>} : vector<128x128xbf16>, vector<128x128xbf16>, vector<128x128xf32> -> vector<128x128xf32>
    %cst_19 = arith.constant dense<0.000000e+00> : vector<128xf32>
    %42 = vector.multi_reduction <add>, %41, %cst_19 [0] : vector<128x128xf32> to vector<128xf32>
    %43 = vector.shape_cast %42 : vector<128xf32> to vector<1x128xf32>
    %cst_20 = arith.constant 1.280000e+02 : f32
    %44 = vector.broadcast %cst_20 : f32 to vector<1x128xf32>
    %45 = arith.divf %43, %44 : vector<1x128xf32>
    %46 = arith.mulf %41, %41 : vector<128x128xf32>
    %cst_21 = arith.constant dense<0.000000e+00> : vector<128xf32>
    %47 = vector.multi_reduction <add>, %46, %cst_21 [0] : vector<128x128xf32> to vector<128xf32>
    %48 = vector.shape_cast %47 : vector<128xf32> to vector<1x128xf32>
    %cst_22 = arith.constant 1.280000e+02 : f32
    %49 = vector.broadcast %cst_22 : f32 to vector<1x128xf32>
    %50 = arith.divf %48, %49 : vector<1x128xf32>
    %51 = arith.mulf %45, %45 : vector<1x128xf32>
    %52 = arith.subf %50, %51 : vector<1x128xf32>
    %c0_23 = arith.constant 0 : index
    %c0_24 = arith.constant 0 : index
    %53 = vector.load %arg5[%c0_23, %c0_24] : memref<2x128xf32, #tpu.memory_space<vmem>>, vector<2x128xf32>
    %54 = vector.broadcast %45 : vector<1x128xf32> to vector<128x128xf32>
    %55 = arith.subf %41, %54 : vector<128x128xf32>
    %cst_25 = arith.constant 9.99999974E-6 : f32
    %56 = vector.broadcast %cst_25 : f32 to vector<1x128xf32>
    %57 = arith.addf %52, %56 : vector<1x128xf32>
    %58 = math.rsqrt %57 : vector<1x128xf32>
    %59 = vector.broadcast %58 : vector<1x128xf32> to vector<128x128xf32>
    %60 = arith.mulf %55, %59 : vector<128x128xf32>
    %61 = vector.extract_strided_slice %53 {offsets = [0, 0], sizes = [1, 128], strides = [1, 1]} : vector<2x128xf32> to vector<1x128xf32>
    %62 = vector.broadcast %61 : vector<1x128xf32> to vector<128x128xf32>
    %63 = arith.mulf %60, %62 : vector<128x128xf32>
    %64 = vector.extract_strided_slice %53 {offsets = [1, 0], sizes = [1, 128], strides = [1, 1]} : vector<2x128xf32> to vector<1x128xf32>
    %65 = vector.broadcast %64 : vector<1x128xf32> to vector<128x128xf32>
    %66 = arith.addf %63, %65 : vector<128x128xf32>
    %c1 = arith.constant 1 : index
    %67 = memref.load %arg6[%c1] : memref<2xf32, #tpu.memory_space<smem>>
    %cst_26 = arith.constant 0.000000e+00 : f32
    %68 = vector.broadcast %cst_26 : f32 to vector<128x128xf32>
    %69 = arith.cmpf oge, %66, %68 : vector<128x128xf32>
    %70 = vector.broadcast %67 : f32 to vector<128x128xf32>
    %71 = arith.mulf %70, %66 : vector<128x128xf32>
    %72 = arith.select %69, %66, %71 : vector<128x128xi1>, vector<128x128xf32>
    %c0_27 = arith.constant 0 : index
    %c0_28 = arith.constant 0 : index
    %73 = vector.load %arg7[%c0_27, %c0_28] : memref<128x128xf32, #tpu.memory_space<vmem>>, vector<128x128xf32>
    tpu.vector_store %arg7[%c0_27, %c0_28], %72 {strides = array<i32>} : memref<128x128xf32, #tpu.memory_space<vmem>>, vector<128x128xf32>,
    return
  }
}

</mosaic_0001>

<llo_original>
// kernel: tpu_custom_call.1
$region0: #{tpu_custom_call.1}
  #allocation0 [shape = 'u32[]', space=smem, size = 0x4, offset = 0x4, fixed_abs, tag = 'smem constant byte address 0x4 - core index']
  #allocation1 [shape = 'u32[144,128]{1,0:T(1,128)}', space=vmem, size = 0x12000, scoped, tag = 'internal scratch']
  %s0 = inlined_call_operand.hbm [shape: bf16[128,128], index: 0, kind: input, shape index: {}]
  %s1 = inlined_call_operand.hbm [shape: bf16[128,128], index: 1, kind: input, shape index: {}]
  %s2 = inlined_call_operand.hbm [shape: bf16[128,128], index: 2, kind: input, shape index: {}]
  %s3 = inlined_call_operand.vmem [shape: f32[2,128], index: 3, kind: input, shape index: {}]
  %s4 = inlined_call_operand.hbm [shape: bf16[128,128], index: 4, kind: input, shape index: {}]
  %s5 = inlined_call_operand.vmem [shape: f32[2,128], index: 5, kind: input, shape index: {}]
  %s6 = inlined_call_operand.vmem [shape: f32[2], index: 6, kind: input, shape index: {}]
  %s7 = inlined_call_operand.hbm [shape: f32[128,128], index: 7, kind: output, shape index: {}]
  %s8 = sld [smem:[#allocation0]]
  $region58: #{tpu_custom_call.1} parent=0
    _
  %s10 = ssub.s32 1, %s8
  %s11 = scalar_select 0, %s10, %s8
  $region1: #{tpu_custom_call.1} parent=0
    #allocation2 [shape = 'u8[32768]{0}', space=vmem, size = 0x8000, scoped, tag = 'input window, operand 0, single buffered']
    #allocation3 [shape = 's32[1]{0}', space=sflag, size = 0x4, scoped, tag = 'scoped memory for tpu_custom_call.1']
    #allocation4 [shape = 's32[1]{0}', space=sflag, size = 0x4, scoped, tag = 'scoped memory for tpu_custom_call.1']
    #allocation5 [shape = 's32[1]{0}', space=sflag, size = 0x4, scoped, tag = 'scoped memory for tpu_custom_call.1']
    #allocation6 [shape = 'u8[32768]{0}', space=vmem, size = 0x8000, scoped, tag = 'input window, operand 1, single buffered']
    #allocation7 [shape = 's32[1]{0}', space=sflag, size = 0x4, scoped, tag = 'scoped memory for tpu_custom_call.1']
    #allocation8 [shape = 'u8[32768]{0}', space=vmem, size = 0x8000, scoped, tag = 'input window, operand 2, single buffered']
    #allocation9 [shape = 'u8[32768]{0}', space=vmem, size = 0x8000, scoped, tag = 'input window, operand 4, single buffered']
    #allocation10 [shape = 's32[1]{0}', space=sflag, size = 0x4, scoped, tag = 'scoped memory for tpu_custom_call.1']
    #allocation11 [shape = 'u8[512]{0}', space=smem, size = 0x200, scoped, tag = 'input window, operand 6, single buffered']
    #allocation12 [shape = 'u8[65536]{0}', space=vmem, size = 0x10000, scoped, tag = 'output window, operand 0, single buffered']
    %12 = vsyncpa [#allocation3], 0
    %13 = vsyncpa [#allocation7], 0
    %14 = vsyncpa [#allocation10], 0
    %15 = vsyncpa [#allocation5], 0
    %16 = vsyncpa [#allocation4], 0
    // Predicated region
    $region2: #{tpu_custom_call.1} parent=1 // pred_check
      _
    $region3: #{tpu_custom_call.1} parent=1 // pred_check_branch
      %18 = sbr.rel (0) target = $region5
    $region4: #{tpu_custom_call.1} parent=1 // pred_region
      %s20 = ssub.s32 1024, 1024
      %21 = vsyncadd [#allocation3], %s20
      %s22 = sshll.u32 [#allocation2], 4
      %s23 = int_to_ptr.vmem [resolvable:$true] %s22
      %28 = dma.hbm_to_vmem [thread:$0]  %s0, 1024, %s23, [#allocation3], 64, 64, 4
    $region5: #{tpu_custom_call.1} parent=1 // pred_fallthru
      _
    // Predicated region
    $region6: #{tpu_custom_call.1} parent=1 // pred_check
      _
    $region7: #{tpu_custom_call.1} parent=1 // pred_check_branch
      %30 = sbr.rel (0) target = $region9
    $region8: #{tpu_custom_call.1} parent=1 // pred_region
      %s32 = ssub.s32 1024, 1024
      %33 = vsyncadd [#allocation7], %s32
      %s34 = sshll.u32 [#allocation6], 4
      %s35 = int_to_ptr.vmem [resolvable:$true] %s34
      %40 = dma.hbm_to_vmem [thread:$0]  %s1, 1024, %s35, [#allocation7], 64, 64, 4
    $region9: #{tpu_custom_call.1} parent=1 // pred_fallthru
      _
    // Predicated region
    $region10: #{tpu_custom_call.1} parent=1 // pred_check
      _
    $region11: #{tpu_custom_call.1} parent=1 // pred_check_branch
      %42 = sbr.rel (0) target = $region13
    $region12: #{tpu_custom_call.1} parent=1 // pred_region
      %s44 = ssub.s32 1024, 1024
      %45 = vsyncadd [#allocation7], %s44
      %s46 = sshll.u32 [#allocation8], 4
      %s47 = int_to_ptr.vmem [resolvable:$true] %s46
      %52 = dma.hbm_to_vmem [thread:$0]  %s2, 1024, %s47, [#allocation7], 64, 64, 4
    $region13: #{tpu_custom_call.1} parent=1 // pred_fallthru
      _
    // Predicated region
    $region14: #{tpu_custom_call.1} parent=1 // pred_check
      _
    $region15: #{tpu_custom_call.1} parent=1 // pred_check_branch
      %54 = sbr.rel (0) target = $region17
    $region16: #{tpu_custom_call.1} parent=1 // pred_region
      _
    $region17: #{tpu_custom_call.1} parent=1 // pred_fallthru
      _
    // Predicated region
    $region18: #{tpu_custom_call.1} parent=1 // pred_check
      _
    $region19: #{tpu_custom_call.1} parent=1 // pred_check_branch
      %56 = sbr.rel (0) target = $region21
    $region20: #{tpu_custom_call.1} parent=1 // pred_region
      %s58 = ssub.s32 1024, 1024
      %59 = vsyncadd [#allocation10], %s58
      %s60 = sshll.u32 [#allocation9], 4
      %s61 = int_to_ptr.vmem [resolvable:$true] %s60
      %66 = dma.hbm_to_vmem [thread:$0]  %s4, 1024, %s61, [#allocation10], 64, 64, 4
    $region21: #{tpu_custom_call.1} parent=1 // pred_fallthru
      _
    // Predicated region
    $region22: #{tpu_custom_call.1} parent=1 // pred_check
      _
    $region23: #{tpu_custom_call.1} parent=1 // pred_check_branch
      %68 = sbr.rel (0) target = $region25
    $region24: #{tpu_custom_call.1} parent=1 // pred_region
      _
    $region25: #{tpu_custom_call.1} parent=1 // pred_fallthru
      _
    // Predicated region
    $region26: #{tpu_custom_call.1} parent=1 // pred_check
      _
    $region27: #{tpu_custom_call.1} parent=1 // pred_check_branch
      %70 = sbr.rel (0) target = $region29
    $region28: #{tpu_custom_call.1} parent=1 // pred_region
      %s72 = ssub.s32 16, 16
      %73 = vsyncadd [#allocation5], %s72
      %s75 = sshll.u32 %s6, 4
      %s76 = int_to_ptr.vmem [resolvable:$true] %s75
      %78 = dma.vmem_to_smem %s76, 16, [#allocation11], [#allocation5]
    $region29: #{tpu_custom_call.1} parent=1 // pred_fallthru
      _
    // Predicated region
    $region30: #{tpu_custom_call.1} parent=1 // pred_check
      _
    $region31: #{tpu_custom_call.1} parent=1 // pred_check_branch
      %80 = sbr.rel (0) target = $region33
    $region32: #{tpu_custom_call.1} parent=1 // pred_region
      %81 = dma.done [#allocation3], 1024
    $region33: #{tpu_custom_call.1} parent=1 // pred_fallthru
      _
    // Predicated region
    $region34: #{tpu_custom_call.1} parent=1 // pred_check
      _
    $region35: #{tpu_custom_call.1} parent=1 // pred_check_branch
      %83 = sbr.rel (0) target = $region37
    $region36: #{tpu_custom_call.1} parent=1 // pred_region
      %84 = dma.done [#allocation7], 1024
    $region37: #{tpu_custom_call.1} parent=1 // pred_fallthru
      _
    // Predicated region
    $region38: #{tpu_custom_call.1} parent=1 // pred_check
      _
    $region39: #{tpu_custom_call.1} parent=1 // pred_check_branch
      %86 = sbr.rel (0) target = $region41
    $region40: #{tpu_custom_call.1} parent=1 // pred_region
      %87 = dma.done [#allocation7], 1024
    $region41: #{tpu_custom_call.1} parent=1 // pred_fallthru
      _
    // Predicated region
    $region42: #{tpu_custom_call.1} parent=1 // pred_check
      _
    $region43: #{tpu_custom_call.1} parent=1 // pred_check_branch
      %89 = sbr.rel (0) target = $region45
    $region44: #{tpu_custom_call.1} parent=1 // pred_region
      %90 = dma.done [#allocation10], 1024
    $region45: #{tpu_custom_call.1} parent=1 // pred_fallthru
      _
    // Predicated region
    $region46: #{tpu_custom_call.1} parent=1 // pred_check
      _
    $region47: #{tpu_custom_call.1} parent=1 // pred_check_branch
      %92 = sbr.rel (0) target = $region49
    $region48: #{tpu_custom_call.1} parent=1 // pred_region
      %93 = dma.done [#allocation5], 16
    $region49: #{tpu_custom_call.1} parent=1 // pred_fallthru
      _
    %94 = sfence
    %v96 = vld [vmem:[#allocation2] sm:$0xf]
    %v97 = vld [vmem:[#allocation2 + $0x4] sm:$0xf]
    %v98 = vld [vmem:[#allocation2 + $0x8] sm:$0xf]
    %v99 = vld [vmem:[#allocation2 + $0xc] sm:$0xf]
    %v100 = vld [vmem:[#allocation2 + $0x10] sm:$0xf]
    %v101 = vld [vmem:[#allocation2 + $0x14] sm:$0xf]
    %v102 = vld [vmem:[#allocation2 + $0x18] sm:$0xf]
    %v103 = vld [vmem:[#allocation2 + $0x1c] sm:$0xf]
    %v104 = vld [vmem:[#allocation2 + $0x20] sm:$0xf]
    %v105 = vld [vmem:[#allocation2 + $0x24] sm:$0xf]
    %v106 = vld [vmem:[#allocation2 + $0x28] sm:$0xf]
    %v107 = vld [vmem:[#allocation2 + $0x2c] sm:$0xf]
    %v108 = vld [vmem:[#allocation2 + $0x30] sm:$0xf]
    %v109 = vld [vmem:[#allocation2 + $0x34] sm:$0xf]
    %v110 = vld [vmem:[#allocation2 + $0x38] sm:$0xf]
    %v111 = vld [vmem:[#allocation2 + $0x3c] sm:$0xf]
    %v112 = vld [vmem:[#allocation6] sm:$0xf]
    %v113 = vld [vmem:[#allocation6 + $0x4] sm:$0xf]
    %v114 = vld [vmem:[#allocation6 + $0x8] sm:$0xf]
    %v115 = vld [vmem:[#allocation6 + $0xc] sm:$0xf]
    %v116 = vld [vmem:[#allocation6 + $0x10] sm:$0xf]
    %v117 = vld [vmem:[#allocation6 + $0x14] sm:$0xf]
    %v118 = vld [vmem:[#allocation6 + $0x18] sm:$0xf]
    %v119 = vld [vmem:[#allocation6 + $0x1c] sm:$0xf]
    %v120 = vld [vmem:[#allocation6 + $0x20] sm:$0xf]
    %v121 = vld [vmem:[#allocation6 + $0x24] sm:$0xf]
    %v122 = vld [vmem:[#allocation6 + $0x28] sm:$0xf]
    %v123 = vld [vmem:[#allocation6 + $0x2c] sm:$0xf]
    %v124 = vld [vmem:[#allocation6 + $0x30] sm:$0xf]
    %v125 = vld [vmem:[#allocation6 + $0x34] sm:$0xf]
    %v126 = vld [vmem:[#allocation6 + $0x38] sm:$0xf]
    %v127 = vld [vmem:[#allocation6 + $0x3c] sm:$0xf]
    %v144 = vunpack.c.l.b16 %v96
    %v145 = vunpack.c.l.b16 %v97
    %v146 = vunpack.c.l.b16 %v98
    %v147 = vunpack.c.l.b16 %v99
    %v148 = vunpack.c.l.b16 %v100
    %v149 = vunpack.c.l.b16 %v101
    %v150 = vunpack.c.l.b16 %v102
    %v151 = vunpack.c.l.b16 %v103
    %v152 = vunpack.c.l.b16 %v104
    %v153 = vunpack.c.l.b16 %v105
    %v154 = vunpack.c.l.b16 %v106
    %v155 = vunpack.c.l.b16 %v107
    %v156 = vunpack.c.l.b16 %v108
    %v157 = vunpack.c.l.b16 %v109
    %v158 = vunpack.c.l.b16 %v110
    %v159 = vunpack.c.l.b16 %v111
    %v160 = vpack.c.b16 %v145, %v144
    %v161 = vpack.c.b16 %v147, %v146
    %v162 = vpack.c.b16 %v149, %v148
    %v163 = vpack.c.b16 %v151, %v150
    %v164 = vpack.c.b16 %v153, %v152
    %v165 = vpack.c.b16 %v155, %v154
    %v166 = vpack.c.b16 %v157, %v156
    %v167 = vpack.c.b16 %v159, %v158
    %v192 = vunpack.c.l.b16 %v112
    %v193 = vunpack.c.l.b16 %v113
    %v194 = vunpack.c.l.b16 %v114
    %v195 = vunpack.c.l.b16 %v115
    %v196 = vunpack.c.l.b16 %v116
    %v197 = vunpack.c.l.b16 %v117
    %v198 = vunpack.c.l.b16 %v118
    %v199 = vunpack.c.l.b16 %v119
    %v200 = vunpack.c.l.b16 %v120
    %v201 = vunpack.c.l.b16 %v121
    %v202 = vunpack.c.l.b16 %v122
    %v203 = vunpack.c.l.b16 %v123
    %v204 = vunpack.c.l.b16 %v124
    %v205 = vunpack.c.l.b16 %v125
    %v206 = vunpack.c.l.b16 %v126
    %v207 = vunpack.c.l.b16 %v127
    %v208 = vpack.c.b16 %v193, %v192
    %v209 = vpack.c.b16 %v195, %v194
    %v210 = vpack.c.b16 %v197, %v196
    %v211 = vpack.c.b16 %v199, %v198
    %v212 = vpack.c.b16 %v201, %v200
    %v213 = vpack.c.b16 %v203, %v202
    %v214 = vpack.c.b16 %v205, %v204
    %v215 = vpack.c.b16 %v207, %v206
    %224 = vmatprep.subr.bf16.mxu0 0
    %225 = vmatpush1.bf16.msra.mxu0 %v215
    %226 = vmatprep.subr.bf16.mxu0 0
    %227 = vmatpush1.bf16.msra.mxu0 %v214
    %228 = vmatprep.subr.bf16.mxu0 0
    %229 = vmatpush1.bf16.msra.mxu0 %v213
    %230 = vmatprep.subr.bf16.mxu0 0
    %231 = vmatpush1.bf16.msra.mxu0 %v212
    %232 = vmatprep.subr.bf16.mxu0 0
    %233 = vmatpush1.bf16.msra.mxu0 %v211
    %234 = vmatprep.subr.bf16.mxu0 0
    %235 = vmatpush1.bf16.msra.mxu0 %v210
    %236 = vmatprep.subr.bf16.mxu0 0
    %237 = vmatpush1.bf16.msra.mxu0 %v209
    %238 = vmatprep.subr.bf16.mxu0 0
    %239 = vmatpush1.bf16.msra.mxu0 %v208
    %240 = vmatprep.subr.bf16.mxu0 0
    %241 = vmatpush2.bf16.msra.mxu0 0
    %242 = vmatprep.subr.bf16.mxu0 0
    %243 = vmatpush2.bf16.msra.mxu0 0
    %244 = vmatprep.subr.bf16.mxu0 0
    %245 = vmatpush2.bf16.msra.mxu0 0
    %246 = vmatprep.subr.bf16.mxu0 0
    %247 = vmatpush2.bf16.msra.mxu0 0
    %248 = vmatprep.subr.bf16.mxu0 0
    %249 = vmatpush2.bf16.msra.mxu0 0
    %250 = vmatprep.subr.bf16.mxu0 0
    %251 = vmatpush2.bf16.msra.mxu0 0
    %252 = vmatprep.subr.bf16.mxu0 0
    %253 = vmatpush2.bf16.msra.mxu0 0
    %254 = vmatprep.subr.bf16.mxu0 0
    %255 = vmatpush2.bf16.msra.mxu0 0
    %256 = vmatprep.mubr.bf16.mxu0 0
    %257 = vmatmul.mubr.bf16.gmra.mxu0 %v160
    %v258 = vpop.f32.mrf.mxu0
    %v259 = vadd.f32 0.0, %v258
    %v260 = vpop.f32.mrf.mxu0
    %v261 = vpop.f32.mrf.mxu0
    %v262 = vadd.f32 0.0, %v261
    %v263 = vpop.f32.mrf.mxu0
    %264 = vmatprep.mubr.bf16.mxu0 0
    %265 = vmatmul.mubr.bf16.gmra.mxu0 %v161
    %v266 = vpop.f32.mrf.mxu0
    %v267 = vadd.f32 0.0, %v266
    %v268 = vpop.f32.mrf.mxu0
    %v269 = vpop.f32.mrf.mxu0
    %v270 = vadd.f32 0.0, %v269
    %v271 = vpop.f32.mrf.mxu0
    %272 = vmatprep.mubr.bf16.mxu0 0
    %273 = vmatmul.mubr.bf16.gmra.mxu0 %v162
    %v274 = vpop.f32.mrf.mxu0
    %v275 = vadd.f32 0.0, %v274
    %v276 = vpop.f32.mrf.mxu0
    %v277 = vpop.f32.mrf.mxu0
    %v278 = vadd.f32 0.0, %v277
    %v279 = vpop.f32.mrf.mxu0
    %280 = vmatprep.mubr.bf16.mxu0 0
    %281 = vmatmul.mubr.bf16.gmra.mxu0 %v163
    %v282 = vpop.f32.mrf.mxu0
    %v283 = vadd.f32 0.0, %v282
    %v284 = vpop.f32.mrf.mxu0
    %v285 = vpop.f32.mrf.mxu0
    %v286 = vadd.f32 0.0, %v285
    %v287 = vpop.f32.mrf.mxu0
    %288 = vmatprep.mubr.bf16.mxu0 0
    %289 = vmatmul.mubr.bf16.gmra.mxu0 %v164
    %v290 = vpop.f32.mrf.mxu0
    %v291 = vadd.f32 0.0, %v290
    %v292 = vpop.f32.mrf.mxu0
    %v293 = vpop.f32.mrf.mxu0
    %v294 = vadd.f32 0.0, %v293
    %v295 = vpop.f32.mrf.mxu0
    %296 = vmatprep.mubr.bf16.mxu0 0
    %297 = vmatmul.mubr.bf16.gmra.mxu0 %v165
    %v298 = vpop.f32.mrf.mxu0
    %v299 = vadd.f32 0.0, %v298
    %v300 = vpop.f32.mrf.mxu0
    %v301 = vpop.f32.mrf.mxu0
    %v302 = vadd.f32 0.0, %v301
    %v303 = vpop.f32.mrf.mxu0
    %304 = vmatprep.mubr.bf16.mxu0 0
    %305 = vmatmul.mubr.bf16.gmra.mxu0 %v166
    %v306 = vpop.f32.mrf.mxu0
    %v307 = vadd.f32 0.0, %v306
    %v308 = vpop.f32.mrf.mxu0
    %v309 = vpop.f32.mrf.mxu0
    %v310 = vadd.f32 0.0, %v309
    %v311 = vpop.f32.mrf.mxu0
    %312 = vmatprep.mubr.bf16.mxu0 0
    %313 = vmatmul.mubr.bf16.gmra.mxu0 %v167
    %v314 = vpop.f32.mrf.mxu0
    %v315 = vadd.f32 0.0, %v314
    %v316 = vpop.f32.mrf.mxu0
    %v317 = vpop.f32.mrf.mxu0
    %v318 = vadd.f32 0.0, %v317
    %v319 = vpop.f32.mrf.mxu0
    %320 = vdwg.mxu0
    %v321 = vpack.c.bf16 %v262, %v259
    %v322 = vpack.c.bf16 %v270, %v267
    %v323 = vpack.c.bf16 %v278, %v275
    %v324 = vpack.c.bf16 %v286, %v283
    %v325 = vpack.c.bf16 %v294, %v291
    %v326 = vpack.c.bf16 %v302, %v299
    %v327 = vpack.c.bf16 %v310, %v307
    %v328 = vpack.c.bf16 %v318, %v315
    %v329 = vld [vmem:[#allocation8] sm:$0xf]
    %v330 = vld [vmem:[#allocation8 + $0x4] sm:$0xf]
    %v331 = vld [vmem:[#allocation8 + $0x8] sm:$0xf]
    %v332 = vld [vmem:[#allocation8 + $0xc] sm:$0xf]
    %v333 = vld [vmem:[#allocation8 + $0x10] sm:$0xf]
    %v334 = vld [vmem:[#allocation8 + $0x14] sm:$0xf]
    %v335 = vld [vmem:[#allocation8 + $0x18] sm:$0xf]
    %v336 = vld [vmem:[#allocation8 + $0x1c] sm:$0xf]
    %v337 = vld [vmem:[#allocation8 + $0x20] sm:$0xf]
    %v338 = vld [vmem:[#allocation8 + $0x24] sm:$0xf]
    %v339 = vld [vmem:[#allocation8 + $0x28] sm:$0xf]
    %v340 = vld [vmem:[#allocation8 + $0x2c] sm:$0xf]
    %v341 = vld [vmem:[#allocation8 + $0x30] sm:$0xf]
    %v342 = vld [vmem:[#allocation8 + $0x34] sm:$0xf]
    %v343 = vld [vmem:[#allocation8 + $0x38] sm:$0xf]
    %v344 = vld [vmem:[#allocation8 + $0x3c] sm:$0xf]
    %v361 = vunpack.c.l.b16 %v329
    %v362 = vunpack.c.l.b16 %v330
    %v363 = vunpack.c.l.b16 %v331
    %v364 = vunpack.c.l.b16 %v332
    %v365 = vunpack.c.l.b16 %v333
    %v366 = vunpack.c.l.b16 %v334
    %v367 = vunpack.c.l.b16 %v335
    %v368 = vunpack.c.l.b16 %v336
    %v369 = vunpack.c.l.b16 %v337
    %v370 = vunpack.c.l.b16 %v338
    %v371 = vunpack.c.l.b16 %v339
    %v372 = vunpack.c.l.b16 %v340
    %v373 = vunpack.c.l.b16 %v341
    %v374 = vunpack.c.l.b16 %v342
    %v375 = vunpack.c.l.b16 %v343
    %v376 = vunpack.c.l.b16 %v344
    %v377 = vpack.c.b16 %v362, %v361
    %v378 = vpack.c.b16 %v364, %v363
    %v379 = vpack.c.b16 %v366, %v365
    %v380 = vpack.c.b16 %v368, %v367
    %v381 = vpack.c.b16 %v370, %v369
    %v382 = vpack.c.b16 %v372, %v371
    %v383 = vpack.c.b16 %v374, %v373
    %v384 = vpack.c.b16 %v376, %v375
    %393 = vmatprep.subr.bf16.mxu0 0
    %394 = vmatpush1.bf16.msra.mxu0 %v384
    %395 = vmatprep.subr.bf16.mxu0 0
    %396 = vmatpush1.bf16.msra.mxu0 %v383
    %397 = vmatprep.subr.bf16.mxu0 0
    %398 = vmatpush1.bf16.msra.mxu0 %v382
    %399 = vmatprep.subr.bf16.mxu0 0
    %400 = vmatpush1.bf16.msra.mxu0 %v381
    %401 = vmatprep.subr.bf16.mxu0 0
    %402 = vmatpush1.bf16.msra.mxu0 %v380
    %403 = vmatprep.subr.bf16.mxu0 0
    %404 = vmatpush1.bf16.msra.mxu0 %v379
    %405 = vmatprep.subr.bf16.mxu0 0
    %406 = vmatpush1.bf16.msra.mxu0 %v378
    %407 = vmatprep.subr.bf16.mxu0 0
    %408 = vmatpush1.bf16.msra.mxu0 %v377
    %409 = vmatprep.subr.bf16.mxu0 0
    %410 = vmatpush2.bf16.msra.mxu0 0
    %411 = vmatprep.subr.bf16.mxu0 0
    %412 = vmatpush2.bf16.msra.mxu0 0
    %413 = vmatprep.subr.bf16.mxu0 0
    %414 = vmatpush2.bf16.msra.mxu0 0
    %415 = vmatprep.subr.bf16.mxu0 0
    %416 = vmatpush2.bf16.msra.mxu0 0
    %417 = vmatprep.subr.bf16.mxu0 0
    %418 = vmatpush2.bf16.msra.mxu0 0
    %419 = vmatprep.subr.bf16.mxu0 0
    %420 = vmatpush2.bf16.msra.mxu0 0
    %421 = vmatprep.subr.bf16.mxu0 0
    %422 = vmatpush2.bf16.msra.mxu0 0
    %423 = vmatprep.subr.bf16.mxu0 0
    %424 = vmatpush2.bf16.msra.mxu0 0
    %425 = vmatprep.mubr.bf16.mxu0 0
    %426 = vmatmul.mubr.bf16.gmra.mxu0 %v321
    %v427 = vpop.f32.mrf.mxu0
    %v428 = vadd.f32 0.0, %v427
    %v429 = vpop.f32.mrf.mxu0
    %v430 = vpop.f32.mrf.mxu0
    %v431 = vadd.f32 0.0, %v430
    %v432 = vpop.f32.mrf.mxu0
    %433 = vmatprep.mubr.bf16.mxu0 0
    %434 = vmatmul.mubr.bf16.gmra.mxu0 %v322
    %v435 = vpop.f32.mrf.mxu0
    %v436 = vadd.f32 0.0, %v435
    %v437 = vpop.f32.mrf.mxu0
    %v438 = vpop.f32.mrf.mxu0
    %v439 = vadd.f32 0.0, %v438
    %v440 = vpop.f32.mrf.mxu0
    %441 = vmatprep.mubr.bf16.mxu0 0
    %442 = vmatmul.mubr.bf16.gmra.mxu0 %v323
    %v443 = vpop.f32.mrf.mxu0
    %v444 = vadd.f32 0.0, %v443
    %v445 = vpop.f32.mrf.mxu0
    %v446 = vpop.f32.mrf.mxu0
    %v447 = vadd.f32 0.0, %v446
    %v448 = vpop.f32.mrf.mxu0
    %449 = vmatprep.mubr.bf16.mxu0 0
    %450 = vmatmul.mubr.bf16.gmra.mxu0 %v324
    %v451 = vpop.f32.mrf.mxu0
    %v452 = vadd.f32 0.0, %v451
    %v453 = vpop.f32.mrf.mxu0
    %v454 = vpop.f32.mrf.mxu0
    %v455 = vadd.f32 0.0, %v454
    %v456 = vpop.f32.mrf.mxu0
    %457 = vmatprep.mubr.bf16.mxu0 0
    %458 = vmatmul.mubr.bf16.gmra.mxu0 %v325
    %v459 = vpop.f32.mrf.mxu0
    %v460 = vadd.f32 0.0, %v459
    %v461 = vpop.f32.mrf.mxu0
    %v462 = vpop.f32.mrf.mxu0
    %v463 = vadd.f32 0.0, %v462
    %v464 = vpop.f32.mrf.mxu0
    %465 = vmatprep.mubr.bf16.mxu0 0
    %466 = vmatmul.mubr.bf16.gmra.mxu0 %v326
    %v467 = vpop.f32.mrf.mxu0
    %v468 = vadd.f32 0.0, %v467
    %v469 = vpop.f32.mrf.mxu0
    %v470 = vpop.f32.mrf.mxu0
    %v471 = vadd.f32 0.0, %v470
    %v472 = vpop.f32.mrf.mxu0
    %473 = vmatprep.mubr.bf16.mxu0 0
    %474 = vmatmul.mubr.bf16.gmra.mxu0 %v327
    %v475 = vpop.f32.mrf.mxu0
    %v476 = vadd.f32 0.0, %v475
    %v477 = vpop.f32.mrf.mxu0
    %v478 = vpop.f32.mrf.mxu0
    %v479 = vadd.f32 0.0, %v478
    %v480 = vpop.f32.mrf.mxu0
    %481 = vmatprep.mubr.bf16.mxu0 0
    %482 = vmatmul.mubr.bf16.gmra.mxu0 %v328
    %v483 = vpop.f32.mrf.mxu0
    %v484 = vadd.f32 0.0, %v483
    %v485 = vpop.f32.mrf.mxu0
    %v486 = vpop.f32.mrf.mxu0
    %v487 = vadd.f32 0.0, %v486
    %v488 = vpop.f32.mrf.mxu0
    %489 = vdwg.mxu0
    %v490 = vadd.f32 %v428, %v431
    %v491 = vadd.f32 %v490, %v436
    %v492 = vadd.f32 %v491, %v439
    %v493 = vadd.f32 %v492, %v444
    %v494 = vadd.f32 %v493, %v447
    %v495 = vadd.f32 %v494, %v452
    %v496 = vadd.f32 %v495, %v455
    %v497 = vadd.f32 %v496, %v460
    %v498 = vadd.f32 %v497, %v463
    %v499 = vadd.f32 %v498, %v468
    %v500 = vadd.f32 %v499, %v471
    %v501 = vadd.f32 %v500, %v476
    %v502 = vadd.f32 %v501, %v479
    %v503 = vadd.f32 %v502, %v484
    %v504 = vadd.f32 %v503, %v487
    %v505 = vrot.slane %v504, 4
    %v506 = vadd.f32 %v504, %v505
    %v507 = vrot.slane %v506, 2
    %v508 = vadd.f32 %v506, %v507
    %v509 = vrot.slane %v508, 1
    %v510 = vadd.f32 %v508, %v509
    %v511 = vrcp.pop 128.0
    %v512 = vmul.f32 %v510, %v511
    %v513 = vmul.f32 %v428, %v428
    %v514 = vmul.f32 %v431, %v431
    %v515 = vmul.f32 %v436, %v436
    %v516 = vmul.f32 %v439, %v439
    %v517 = vmul.f32 %v444, %v444
    %v518 = vmul.f32 %v447, %v447
    %v519 = vmul.f32 %v452, %v452
    %v520 = vmul.f32 %v455, %v455
    %v521 = vmul.f32 %v460, %v460
    %v522 = vmul.f32 %v463, %v463
    %v523 = vmul.f32 %v468, %v468
    %v524 = vmul.f32 %v471, %v471
    %v525 = vmul.f32 %v476, %v476
    %v526 = vmul.f32 %v479, %v479
    %v527 = vmul.f32 %v484, %v484
    %v528 = vmul.f32 %v487, %v487
    %v529 = vadd.f32 %v513, %v514
    %v530 = vadd.f32 %v529, %v515
    %v531 = vadd.f32 %v530, %v516
    %v532 = vadd.f32 %v531, %v517
    %v533 = vadd.f32 %v532, %v518
    %v534 = vadd.f32 %v533, %v519
    %v535 = vadd.f32 %v534, %v520
    %v536 = vadd.f32 %v535, %v521
    %v537 = vadd.f32 %v536, %v522
    %v538 = vadd.f32 %v537, %v523
    %v539 = vadd.f32 %v538, %v524
    %v540 = vadd.f32 %v539, %v525
    %v541 = vadd.f32 %v540, %v526
    %v542 = vadd.f32 %v541, %v527
    %v543 = vadd.f32 %v542, %v528
    %v544 = vrot.slane %v543, 4
    %v545 = vadd.f32 %v543, %v544
    %v546 = vrot.slane %v545, 2
    %v547 = vadd.f32 %v545, %v546
    %v548 = vrot.slane %v547, 1
    %v549 = vadd.f32 %v547, %v548
    %v550 = vmul.f32 %v549, %v511
    %v551 = vmul.f32 %v512, %v512
    %v552 = vsub.f32 %v550, %v551
    %v553 = vld [vmem:[%s3] sm:$0x3]
    %v554 = vsub.f32 %v428, %v512
    %v555 = vsub.f32 %v431, %v512
    %v556 = vsub.f32 %v436, %v512
    %v557 = vsub.f32 %v439, %v512
    %v558 = vsub.f32 %v444, %v512
    %v559 = vsub.f32 %v447, %v512
    %v560 = vsub.f32 %v452, %v512
    %v561 = vsub.f32 %v455, %v512
    %v562 = vsub.f32 %v460, %v512
    %v563 = vsub.f32 %v463, %v512
    %v564 = vsub.f32 %v468, %v512
    %v565 = vsub.f32 %v471, %v512
    %v566 = vsub.f32 %v476, %v512
    %v567 = vsub.f32 %v479, %v512
    %v568 = vsub.f32 %v484, %v512
    %v569 = vsub.f32 %v487, %v512
    %v570 = vadd.f32 %v552, 1e-05
    %v571 = vrsqrt.pop %v570
    %v572 = vmul.f32 %v554, %v571
    %v573 = vmul.f32 %v555, %v571
    %v574 = vmul.f32 %v556, %v571
    %v575 = vmul.f32 %v557, %v571
    %v576 = vmul.f32 %v558, %v571
    %v577 = vmul.f32 %v559, %v571
    %v578 = vmul.f32 %v560, %v571
    %v579 = vmul.f32 %v561, %v571
    %v580 = vmul.f32 %v562, %v571
    %v581 = vmul.f32 %v563, %v571
    %v582 = vmul.f32 %v564, %v571
    %v583 = vmul.f32 %v565, %v571
    %v584 = vmul.f32 %v566, %v571
    %v585 = vmul.f32 %v567, %v571
    %v586 = vmul.f32 %v568, %v571
    %v587 = vmul.f32 %v569, %v571
    %v588 = vlaneseq
    %v589 = vshrl.u32 %v588, 7
    %v590 = vsub.s32 0, %v589
    %v591 = vrot.slane %v553, %v590
    %v592 = vmul.f32 %v572, %v591
    %v593 = vmul.f32 %v573, %v591
    %v594 = vmul.f32 %v574, %v591
    %v595 = vmul.f32 %v575, %v591
    %v596 = vmul.f32 %v576, %v591
    %v597 = vmul.f32 %v577, %v591
    %v598 = vmul.f32 %v578, %v591
    %v599 = vmul.f32 %v579, %v591
    %v600 = vmul.f32 %v580, %v591
    %v601 = vmul.f32 %v581, %v591
    %v602 = vmul.f32 %v582, %v591
    %v603 = vmul.f32 %v583, %v591
    %v604 = vmul.f32 %v584, %v591
    %v605 = vmul.f32 %v585, %v591
    %v606 = vmul.f32 %v586, %v591
    %v607 = vmul.f32 %v587, %v591
    %v608 = vlaneseq
    %v609 = vshrl.u32 %v608, 7
    %v610 = vsub.s32 1, %v609
    %v611 = vrot.slane %v553, %v610
    %v612 = vadd.f32 %v592, %v611
    %v613 = vadd.f32 %v593, %v611
    %v614 = vadd.f32 %v594, %v611
    %v615 = vadd.f32 %v595, %v611
    %v616 = vadd.f32 %v596, %v611
    %v617 = vadd.f32 %v597, %v611
    %v618 = vadd.f32 %v598, %v611
    %v619 = vadd.f32 %v599, %v611
    %v620 = vadd.f32 %v600, %v611
    %v621 = vadd.f32 %v601, %v611
    %v622 = vadd.f32 %v602, %v611
    %v623 = vadd.f32 %v603, %v611
    %v624 = vadd.f32 %v604, %v611
    %v625 = vadd.f32 %v605, %v611
    %v626 = vadd.f32 %v606, %v611
    %v627 = vadd.f32 %v607, %v611
    %s628 = sld [smem:[#allocation11]]
    %vm629 = vcmp.ge.f32.partialorder %v612, 0.0
    %vm630 = vcmp.ge.f32.partialorder %v613, 0.0
    %vm631 = vcmp.ge.f32.partialorder %v614, 0.0
    %vm632 = vcmp.ge.f32.partialorder %v615, 0.0
    %vm633 = vcmp.ge.f32.partialorder %v616, 0.0
    %vm634 = vcmp.ge.f32.partialorder %v617, 0.0
    %vm635 = vcmp.ge.f32.partialorder %v618, 0.0
    %vm636 = vcmp.ge.f32.partialorder %v619, 0.0
    %vm637 = vcmp.ge.f32.partialorder %v620, 0.0
    %vm638 = vcmp.ge.f32.partialorder %v621, 0.0
    %vm639 = vcmp.ge.f32.partialorder %v622, 0.0
    %vm640 = vcmp.ge.f32.partialorder %v623, 0.0
    %vm641 = vcmp.ge.f32.partialorder %v624, 0.0
    %vm642 = vcmp.ge.f32.partialorder %v625, 0.0
    %vm643 = vcmp.ge.f32.partialorder %v626, 0.0
    %vm644 = vcmp.ge.f32.partialorder %v627, 0.0
    %v645 = vstv %s628
    %v646 = vmul.f32 %v645, %v612
    %v647 = vmul.f32 %v645, %v613
    %v648 = vmul.f32 %v645, %v614
    %v649 = vmul.f32 %v645, %v615
    %v650 = vmul.f32 %v645, %v616
    %v651 = vmul.f32 %v645, %v617
    %v652 = vmul.f32 %v645, %v618
    %v653 = vmul.f32 %v645, %v619
    %v654 = vmul.f32 %v645, %v620
    %v655 = vmul.f32 %v645, %v621
    %v656 = vmul.f32 %v645, %v622
    %v657 = vmul.f32 %v645, %v623
    %v658 = vmul.f32 %v645, %v624
    %v659 = vmul.f32 %v645, %v625
    %v660 = vmul.f32 %v645, %v626
    %v661 = vmul.f32 %v645, %v627
    %v662 = vsel %vm629, %v612, %v646
    %v663 = vsel %vm630, %v613, %v647
    %v664 = vsel %vm631, %v614, %v648
    %v665 = vsel %vm632, %v615, %v649
    %v666 = vsel %vm633, %v616, %v650
    %v667 = vsel %vm634, %v617, %v651
    %v668 = vsel %vm635, %v618, %v652
    %v669 = vsel %vm636, %v619, %v653
    %v670 = vsel %vm637, %v620, %v654
    %v671 = vsel %vm638, %v621, %v655
    %v672 = vsel %vm639, %v622, %v656
    %v673 = vsel %vm640, %v623, %v657
    %v674 = vsel %vm641, %v624, %v658
    %v675 = vsel %vm642, %v625, %v659
    %v676 = vsel %vm643, %v626, %v660
    %v677 = vsel %vm644, %v627, %v661
    %v678 = vpack.c.bf16 %v663, %v662
    %v679 = vpack.c.bf16 %v665, %v664
    %v680 = vpack.c.bf16 %v667, %v666
    %v681 = vpack.c.bf16 %v669, %v668
    %v682 = vpack.c.bf16 %v671, %v670
    %v683 = vpack.c.bf16 %v673, %v672
    %v684 = vpack.c.bf16 %v675, %v674
    %v685 = vpack.c.bf16 %v677, %v676
    %v686 = vld [vmem:[#allocation9] sm:$0xf]
    %v687 = vld [vmem:[#allocation9 + $0x4] sm:$0xf]
    %v688 = vld [vmem:[#allocation9 + $0x8] sm:$0xf]
    %v689 = vld [vmem:[#allocation9 + $0xc] sm:$0xf]
    %v690 = vld [vmem:[#allocation9 + $0x10] sm:$0xf]
    %v691 = vld [vmem:[#allocation9 + $0x14] sm:$0xf]
    %v692 = vld [vmem:[#allocation9 + $0x18] sm:$0xf]
    %v693 = vld [vmem:[#allocation9 + $0x1c] sm:$0xf]
    %v694 = vld [vmem:[#allocation9 + $0x20] sm:$0xf]
    %v695 = vld [vmem:[#allocation9 + $0x24] sm:$0xf]
    %v696 = vld [vmem:[#allocation9 + $0x28] sm:$0xf]
    %v697 = vld [vmem:[#allocation9 + $0x2c] sm:$0xf]
    %v698 = vld [vmem:[#allocation9 + $0x30] sm:$0xf]
    %v699 = vld [vmem:[#allocation9 + $0x34] sm:$0xf]
    %v700 = vld [vmem:[#allocation9 + $0x38] sm:$0xf]
    %v701 = vld [vmem:[#allocation9 + $0x3c] sm:$0xf]
    %v718 = vunpack.c.l.b16 %v686
    %v719 = vunpack.c.l.b16 %v687
    %v720 = vunpack.c.l.b16 %v688
    %v721 = vunpack.c.l.b16 %v689
    %v722 = vunpack.c.l.b16 %v690
    %v723 = vunpack.c.l.b16 %v691
    %v724 = vunpack.c.l.b16 %v692
    %v725 = vunpack.c.l.b16 %v693
    %v726 = vunpack.c.l.b16 %v694
    %v727 = vunpack.c.l.b16 %v695
    %v728 = vunpack.c.l.b16 %v696
    %v729 = vunpack.c.l.b16 %v697
    %v730 = vunpack.c.l.b16 %v698
    %v731 = vunpack.c.l.b16 %v699
    %v732 = vunpack.c.l.b16 %v700
    %v733 = vunpack.c.l.b16 %v701
    %v734 = vpack.c.b16 %v719, %v718
    %v735 = vpack.c.b16 %v721, %v720
    %v736 = vpack.c.b16 %v723, %v722
    %v737 = vpack.c.b16 %v725, %v724
    %v738 = vpack.c.b16 %v727, %v726
    %v739 = vpack.c.b16 %v729, %v728
    %v740 = vpack.c.b16 %v731, %v730
    %v741 = vpack.c.b16 %v733, %v732
    %750 = vmatprep.subr.bf16.mxu0 0
    %751 = vmatpush1.bf16.msra.mxu0 %v741
    %752 = vmatprep.subr.bf16.mxu0 0
    %753 = vmatpush1.bf16.msra.mxu0 %v740
    %754 = vmatprep.subr.bf16.mxu0 0
    %755 = vmatpush1.bf16.msra.mxu0 %v739
    %756 = vmatprep.subr.bf16.mxu0 0
    %757 = vmatpush1.bf16.msra.mxu0 %v738
    %758 = vmatprep.subr.bf16.mxu0 0
    %759 = vmatpush1.bf16.msra.mxu0 %v737
    %760 = vmatprep.subr.bf16.mxu0 0
    %761 = vmatpush1.bf16.msra.mxu0 %v736
    %762 = vmatprep.subr.bf16.mxu0 0
    %763 = vmatpush1.bf16.msra.mxu0 %v735
    %764 = vmatprep.subr.bf16.mxu0 0
    %765 = vmatpush1.bf16.msra.mxu0 %v734
    %766 = vmatprep.subr.bf16.mxu0 0
    %767 = vmatpush2.bf16.msra.mxu0 0
    %768 = vmatprep.subr.bf16.mxu0 0
    %769 = vmatpush2.bf16.msra.mxu0 0
    %770 = vmatprep.subr.bf16.mxu0 0
    %771 = vmatpush2.bf16.msra.mxu0 0
    %772 = vmatprep.subr.bf16.mxu0 0
    %773 = vmatpush2.bf16.msra.mxu0 0
    %774 = vmatprep.subr.bf16.mxu0 0
    %775 = vmatpush2.bf16.msra.mxu0 0
    %776 = vmatprep.subr.bf16.mxu0 0
    %777 = vmatpush2.bf16.msra.mxu0 0
    %778 = vmatprep.subr.bf16.mxu0 0
    %779 = vmatpush2.bf16.msra.mxu0 0
    %780 = vmatprep.subr.bf16.mxu0 0
    %781 = vmatpush2.bf16.msra.mxu0 0
    %782 = vmatprep.mubr.bf16.mxu0 0
    %783 = vmatmul.mubr.bf16.gmra.mxu0 %v678
    %v784 = vpop.f32.mrf.mxu0
    %v785 = vadd.f32 0.0, %v784
    %v786 = vpop.f32.mrf.mxu0
    %v787 = vpop.f32.mrf.mxu0
    %v788 = vadd.f32 0.0, %v787
    %v789 = vpop.f32.mrf.mxu0
    %790 = vmatprep.mubr.bf16.mxu0 0
    %791 = vmatmul.mubr.bf16.gmra.mxu0 %v679
    %v792 = vpop.f32.mrf.mxu0
    %v793 = vadd.f32 0.0, %v792
    %v794 = vpop.f32.mrf.mxu0
    %v795 = vpop.f32.mrf.mxu0
    %v796 = vadd.f32 0.0, %v795
    %v797 = vpop.f32.mrf.mxu0
    %798 = vmatprep.mubr.bf16.mxu0 0
    %799 = vmatmul.mubr.bf16.gmra.mxu0 %v680
    %v800 = vpop.f32.mrf.mxu0
    %v801 = vadd.f32 0.0, %v800
    %v802 = vpop.f32.mrf.mxu0
    %v803 = vpop.f32.mrf.mxu0
    %v804 = vadd.f32 0.0, %v803
    %v805 = vpop.f32.mrf.mxu0
    %806 = vmatprep.mubr.bf16.mxu0 0
    %807 = vmatmul.mubr.bf16.gmra.mxu0 %v681
    %v808 = vpop.f32.mrf.mxu0
    %v809 = vadd.f32 0.0, %v808
    %v810 = vpop.f32.mrf.mxu0
    %v811 = vpop.f32.mrf.mxu0
    %v812 = vadd.f32 0.0, %v811
    %v813 = vpop.f32.mrf.mxu0
    %814 = vmatprep.mubr.bf16.mxu0 0
    %815 = vmatmul.mubr.bf16.gmra.mxu0 %v682
    %v816 = vpop.f32.mrf.mxu0
    %v817 = vadd.f32 0.0, %v816
    %v818 = vpop.f32.mrf.mxu0
    %v819 = vpop.f32.mrf.mxu0
    %v820 = vadd.f32 0.0, %v819
    %v821 = vpop.f32.mrf.mxu0
    %822 = vmatprep.mubr.bf16.mxu0 0
    %823 = vmatmul.mubr.bf16.gmra.mxu0 %v683
    %v824 = vpop.f32.mrf.mxu0
    %v825 = vadd.f32 0.0, %v824
    %v826 = vpop.f32.mrf.mxu0
    %v827 = vpop.f32.mrf.mxu0
    %v828 = vadd.f32 0.0, %v827
    %v829 = vpop.f32.mrf.mxu0
    %830 = vmatprep.mubr.bf16.mxu0 0
    %831 = vmatmul.mubr.bf16.gmra.mxu0 %v684
    %v832 = vpop.f32.mrf.mxu0
    %v833 = vadd.f32 0.0, %v832
    %v834 = vpop.f32.mrf.mxu0
    %v835 = vpop.f32.mrf.mxu0
    %v836 = vadd.f32 0.0, %v835
    %v837 = vpop.f32.mrf.mxu0
    %838 = vmatprep.mubr.bf16.mxu0 0
    %839 = vmatmul.mubr.bf16.gmra.mxu0 %v685
    %v840 = vpop.f32.mrf.mxu0
    %v841 = vadd.f32 0.0, %v840
    %v842 = vpop.f32.mrf.mxu0
    %v843 = vpop.f32.mrf.mxu0
    %v844 = vadd.f32 0.0, %v843
    %v845 = vpop.f32.mrf.mxu0
    %846 = vdwg.mxu0
    %v847 = vpack.c.bf16 %v788, %v785
    %v848 = vpack.c.bf16 %v796, %v793
    %v849 = vpack.c.bf16 %v804, %v801
    %v850 = vpack.c.bf16 %v812, %v809
    %v851 = vpack.c.bf16 %v820, %v817
    %v852 = vpack.c.bf16 %v828, %v825
    %v853 = vpack.c.bf16 %v836, %v833
    %v854 = vpack.c.bf16 %v844, %v841
    %855 = vmatprep.subr.bf16.mxu0 0
    %856 = vmatpush1.bf16.msra.mxu0 %v854
    %857 = vmatprep.subr.bf16.mxu0 0
    %858 = vmatpush1.bf16.msra.mxu0 %v853
    %859 = vmatprep.subr.bf16.mxu0 0
    %860 = vmatpush1.bf16.msra.mxu0 %v852
    %861 = vmatprep.subr.bf16.mxu0 0
    %862 = vmatpush1.bf16.msra.mxu0 %v851
    %863 = vmatprep.subr.bf16.mxu0 0
    %864 = vmatpush1.bf16.msra.mxu0 %v850
    %865 = vmatprep.subr.bf16.mxu0 0
    %866 = vmatpush1.bf16.msra.mxu0 %v849
    %867 = vmatprep.subr.bf16.mxu0 0
    %868 = vmatpush1.bf16.msra.mxu0 %v848
    %869 = vmatprep.subr.bf16.mxu0 0
    %870 = vmatpush1.bf16.msra.mxu0 %v847
    %871 = vmatprep.subr.bf16.mxu0 0
    %872 = vmatpush2.bf16.msra.mxu0 0
    %873 = vmatprep.subr.bf16.mxu0 0
    %874 = vmatpush2.bf16.msra.mxu0 0
    %875 = vmatprep.subr.bf16.mxu0 0
    %876 = vmatpush2.bf16.msra.mxu0 0
    %877 = vmatprep.subr.bf16.mxu0 0
    %878 = vmatpush2.bf16.msra.mxu0 0
    %879 = vmatprep.subr.bf16.mxu0 0
    %880 = vmatpush2.bf16.msra.mxu0 0
    %881 = vmatprep.subr.bf16.mxu0 0
    %882 = vmatpush2.bf16.msra.mxu0 0
    %883 = vmatprep.subr.bf16.mxu0 0
    %884 = vmatpush2.bf16.msra.mxu0 0
    %885 = vmatprep.subr.bf16.mxu0 0
    %886 = vmatpush2.bf16.msra.mxu0 0
    %887 = vmatprep.mubr.bf16.mxu0 0
    %888 = vmatmul.mubr.bf16.gmra.mxu0 %v160
    %v889 = vpop.f32.mrf.mxu0
    %v890 = vadd.f32 0.0, %v889
    %v891 = vpop.f32.mrf.mxu0
    %v892 = vpop.f32.mrf.mxu0
    %v893 = vadd.f32 0.0, %v892
    %v894 = vpop.f32.mrf.mxu0
    %895 = vmatprep.mubr.bf16.mxu0 0
    %896 = vmatmul.mubr.bf16.gmra.mxu0 %v161
    %v897 = vpop.f32.mrf.mxu0
    %v898 = vadd.f32 0.0, %v897
    %v899 = vpop.f32.mrf.mxu0
    %v900 = vpop.f32.mrf.mxu0
    %v901 = vadd.f32 0.0, %v900
    %v902 = vpop.f32.mrf.mxu0
    %903 = vmatprep.mubr.bf16.mxu0 0
    %904 = vmatmul.mubr.bf16.gmra.mxu0 %v162
    %v905 = vpop.f32.mrf.mxu0
    %v906 = vadd.f32 0.0, %v905
    %v907 = vpop.f32.mrf.mxu0
    %v908 = vpop.f32.mrf.mxu0
    %v909 = vadd.f32 0.0, %v908
    %v910 = vpop.f32.mrf.mxu0
    %911 = vmatprep.mubr.bf16.mxu0 0
    %912 = vmatmul.mubr.bf16.gmra.mxu0 %v163
    %v913 = vpop.f32.mrf.mxu0
    %v914 = vadd.f32 0.0, %v913
    %v915 = vpop.f32.mrf.mxu0
    %v916 = vpop.f32.mrf.mxu0
    %v917 = vadd.f32 0.0, %v916
    %v918 = vpop.f32.mrf.mxu0
    %919 = vmatprep.mubr.bf16.mxu0 0
    %920 = vmatmul.mubr.bf16.gmra.mxu0 %v164
    %v921 = vpop.f32.mrf.mxu0
    %v922 = vadd.f32 0.0, %v921
    %v923 = vpop.f32.mrf.mxu0
    %v924 = vpop.f32.mrf.mxu0
    %v925 = vadd.f32 0.0, %v924
    %v926 = vpop.f32.mrf.mxu0
    %927 = vmatprep.mubr.bf16.mxu0 0
    %928 = vmatmul.mubr.bf16.gmra.mxu0 %v165
    %v929 = vpop.f32.mrf.mxu0
    %v930 = vadd.f32 0.0, %v929
    %v931 = vpop.f32.mrf.mxu0
    %v932 = vpop.f32.mrf.mxu0
    %v933 = vadd.f32 0.0, %v932
    %v934 = vpop.f32.mrf.mxu0
    %935 = vmatprep.mubr.bf16.mxu0 0
    %936 = vmatmul.mubr.bf16.gmra.mxu0 %v166
    %v937 = vpop.f32.mrf.mxu0
    %v938 = vadd.f32 0.0, %v937
    %v939 = vpop.f32.mrf.mxu0
    %v940 = vpop.f32.mrf.mxu0
    %v941 = vadd.f32 0.0, %v940
    %v942 = vpop.f32.mrf.mxu0
    %943 = vmatprep.mubr.bf16.mxu0 0
    %944 = vmatmul.mubr.bf16.gmra.mxu0 %v167
    %v945 = vpop.f32.mrf.mxu0
    %v946 = vadd.f32 0.0, %v945
    %v947 = vpop.f32.mrf.mxu0
    %v948 = vpop.f32.mrf.mxu0
    %v949 = vadd.f32 0.0, %v948
    %v950 = vpop.f32.mrf.mxu0
    %951 = vdwg.mxu0
    %v952 = vadd.f32 %v890, %v893
    %v953 = vadd.f32 %v952, %v898
    %v954 = vadd.f32 %v953, %v901
    %v955 = vadd.f32 %v954, %v906
    %v956 = vadd.f32 %v955, %v909
    %v957 = vadd.f32 %v956, %v914
    %v958 = vadd.f32 %v957, %v917
    %v959 = vadd.f32 %v958, %v922
    %v960 = vadd.f32 %v959, %v925
    %v961 = vadd.f32 %v960, %v930
    %v962 = vadd.f32 %v961, %v933
    %v963 = vadd.f32 %v962, %v938
    %v964 = vadd.f32 %v963, %v941
    %v965 = vadd.f32 %v964, %v946
    %v966 = vadd.f32 %v965, %v949
    %v967 = vrot.slane %v966, 4
    %v968 = vadd.f32 %v966, %v967
    %v969 = vrot.slane %v968, 2
    %v970 = vadd.f32 %v968, %v969
    %v971 = vrot.slane %v970, 1
    %v972 = vadd.f32 %v970, %v971
    %v973 = vmul.f32 %v972, %v511
    %v974 = vmul.f32 %v890, %v890
    %v975 = vmul.f32 %v893, %v893
    %v976 = vmul.f32 %v898, %v898
    %v977 = vmul.f32 %v901, %v901
    %v978 = vmul.f32 %v906, %v906
    %v979 = vmul.f32 %v909, %v909
    %v980 = vmul.f32 %v914, %v914
    %v981 = vmul.f32 %v917, %v917
    %v982 = vmul.f32 %v922, %v922
    %v983 = vmul.f32 %v925, %v925
    %v984 = vmul.f32 %v930, %v930
    %v985 = vmul.f32 %v933, %v933
    %v986 = vmul.f32 %v938, %v938
    %v987 = vmul.f32 %v941, %v941
    %v988 = vmul.f32 %v946, %v946
    %v989 = vmul.f32 %v949, %v949
    %v990 = vadd.f32 %v974, %v975
    %v991 = vadd.f32 %v990, %v976
    %v992 = vadd.f32 %v991, %v977
    %v993 = vadd.f32 %v992, %v978
    %v994 = vadd.f32 %v993, %v979
    %v995 = vadd.f32 %v994, %v980
    %v996 = vadd.f32 %v995, %v981
    %v997 = vadd.f32 %v996, %v982
    %v998 = vadd.f32 %v997, %v983
    %v999 = vadd.f32 %v998, %v984
    %v1000 = vadd.f32 %v999, %v985
    %v1001 = vadd.f32 %v1000, %v986
    %v1002 = vadd.f32 %v1001, %v987
    %v1003 = vadd.f32 %v1002, %v988
    %v1004 = vadd.f32 %v1003, %v989
    %v1005 = vrot.slane %v1004, 4
    %v1006 = vadd.f32 %v1004, %v1005
    %v1007 = vrot.slane %v1006, 2
    %v1008 = vadd.f32 %v1006, %v1007
    %v1009 = vrot.slane %v1008, 1
    %v1010 = vadd.f32 %v1008, %v1009
    %v1011 = vmul.f32 %v1010, %v511
    %v1012 = vmul.f32 %v973, %v973
    %v1013 = vsub.f32 %v1011, %v1012
    %v1014 = vld [vmem:[%s5] sm:$0x3]
    %v1015 = vsub.f32 %v890, %v973
    %v1016 = vsub.f32 %v893, %v973
    %v1017 = vsub.f32 %v898, %v973
    %v1018 = vsub.f32 %v901, %v973
    %v1019 = vsub.f32 %v906, %v973
    %v1020 = vsub.f32 %v909, %v973
    %v1021 = vsub.f32 %v914, %v973
    %v1022 = vsub.f32 %v917, %v973
    %v1023 = vsub.f32 %v922, %v973
    %v1024 = vsub.f32 %v925, %v973
    %v1025 = vsub.f32 %v930, %v973
    %v1026 = vsub.f32 %v933, %v973
    %v1027 = vsub.f32 %v938, %v973
    %v1028 = vsub.f32 %v941, %v973
    %v1029 = vsub.f32 %v946, %v973
    %v1030 = vsub.f32 %v949, %v973
    %v1031 = vadd.f32 %v1013, 1e-05
    %v1032 = vrsqrt.pop %v1031
    %v1033 = vmul.f32 %v1015, %v1032
    %v1034 = vmul.f32 %v1016, %v1032
    %v1035 = vmul.f32 %v1017, %v1032
    %v1036 = vmul.f32 %v1018, %v1032
    %v1037 = vmul.f32 %v1019, %v1032
    %v1038 = vmul.f32 %v1020, %v1032
    %v1039 = vmul.f32 %v1021, %v1032
    %v1040 = vmul.f32 %v1022, %v1032
    %v1041 = vmul.f32 %v1023, %v1032
    %v1042 = vmul.f32 %v1024, %v1032
    %v1043 = vmul.f32 %v1025, %v1032
    %v1044 = vmul.f32 %v1026, %v1032
    %v1045 = vmul.f32 %v1027, %v1032
    %v1046 = vmul.f32 %v1028, %v1032
    %v1047 = vmul.f32 %v1029, %v1032
    %v1048 = vmul.f32 %v1030, %v1032
    %v1049 = vlaneseq
    %v1050 = vshrl.u32 %v1049, 7
    %v1051 = vsub.s32 0, %v1050
    %v1052 = vrot.slane %v1014, %v1051
    %v1053 = vmul.f32 %v1033, %v1052
    %v1054 = vmul.f32 %v1034, %v1052
    %v1055 = vmul.f32 %v1035, %v1052
    %v1056 = vmul.f32 %v1036, %v1052
    %v1057 = vmul.f32 %v1037, %v1052
    %v1058 = vmul.f32 %v1038, %v1052
    %v1059 = vmul.f32 %v1039, %v1052
    %v1060 = vmul.f32 %v1040, %v1052
    %v1061 = vmul.f32 %v1041, %v1052
    %v1062 = vmul.f32 %v1042, %v1052
    %v1063 = vmul.f32 %v1043, %v1052
    %v1064 = vmul.f32 %v1044, %v1052
    %v1065 = vmul.f32 %v1045, %v1052
    %v1066 = vmul.f32 %v1046, %v1052
    %v1067 = vmul.f32 %v1047, %v1052
    %v1068 = vmul.f32 %v1048, %v1052
    %v1069 = vlaneseq
    %v1070 = vshrl.u32 %v1069, 7
    %v1071 = vsub.s32 1, %v1070
    %v1072 = vrot.slane %v1014, %v1071
    %v1073 = vadd.f32 %v1053, %v1072
    %v1074 = vadd.f32 %v1054, %v1072
    %v1075 = vadd.f32 %v1055, %v1072
    %v1076 = vadd.f32 %v1056, %v1072
    %v1077 = vadd.f32 %v1057, %v1072
    %v1078 = vadd.f32 %v1058, %v1072
    %v1079 = vadd.f32 %v1059, %v1072
    %v1080 = vadd.f32 %v1060, %v1072
    %v1081 = vadd.f32 %v1061, %v1072
    %v1082 = vadd.f32 %v1062, %v1072
    %v1083 = vadd.f32 %v1063, %v1072
    %v1084 = vadd.f32 %v1064, %v1072
    %v1085 = vadd.f32 %v1065, %v1072
    %v1086 = vadd.f32 %v1066, %v1072
    %v1087 = vadd.f32 %v1067, %v1072
    %v1088 = vadd.f32 %v1068, %v1072
    %s1089 = sld [smem:[#allocation11 + $0x1]]
    %vm1090 = vcmp.ge.f32.partialorder %v1073, 0.0
    %vm1091 = vcmp.ge.f32.partialorder %v1074, 0.0
    %vm1092 = vcmp.ge.f32.partialorder %v1075, 0.0
    %vm1093 = vcmp.ge.f32.partialorder %v1076, 0.0
    %vm1094 = vcmp.ge.f32.partialorder %v1077, 0.0
    %vm1095 = vcmp.ge.f32.partialorder %v1078, 0.0
    %vm1096 = vcmp.ge.f32.partialorder %v1079, 0.0
    %vm1097 = vcmp.ge.f32.partialorder %v1080, 0.0
    %vm1098 = vcmp.ge.f32.partialorder %v1081, 0.0
    %vm1099 = vcmp.ge.f32.partialorder %v1082, 0.0
    %vm1100 = vcmp.ge.f32.partialorder %v1083, 0.0
    %vm1101 = vcmp.ge.f32.partialorder %v1084, 0.0
    %vm1102 = vcmp.ge.f32.partialorder %v1085, 0.0
    %vm1103 = vcmp.ge.f32.partialorder %v1086, 0.0
    %vm1104 = vcmp.ge.f32.partialorder %v1087, 0.0
    %vm1105 = vcmp.ge.f32.partialorder %v1088, 0.0
    %v1106 = vstv %s1089
    %v1107 = vmul.f32 %v1106, %v1073
    %v1108 = vmul.f32 %v1106, %v1074
    %v1109 = vmul.f32 %v1106, %v1075
    %v1110 = vmul.f32 %v1106, %v1076
    %v1111 = vmul.f32 %v1106, %v1077
    %v1112 = vmul.f32 %v1106, %v1078
    %v1113 = vmul.f32 %v1106, %v1079
    %v1114 = vmul.f32 %v1106, %v1080
    %v1115 = vmul.f32 %v1106, %v1081
    %v1116 = vmul.f32 %v1106, %v1082
    %v1117 = vmul.f32 %v1106, %v1083
    %v1118 = vmul.f32 %v1106, %v1084
    %v1119 = vmul.f32 %v1106, %v1085
    %v1120 = vmul.f32 %v1106, %v1086
    %v1121 = vmul.f32 %v1106, %v1087
    %v1122 = vmul.f32 %v1106, %v1088
    %v1123 = vsel %vm1090, %v1073, %v1107
    %v1124 = vsel %vm1091, %v1074, %v1108
    %v1125 = vsel %vm1092, %v1075, %v1109
    %v1126 = vsel %vm1093, %v1076, %v1110
    %v1127 = vsel %vm1094, %v1077, %v1111
    %v1128 = vsel %vm1095, %v1078, %v1112
    %v1129 = vsel %vm1096, %v1079, %v1113
    %v1130 = vsel %vm1097, %v1080, %v1114
    %v1131 = vsel %vm1098, %v1081, %v1115
    %v1132 = vsel %vm1099, %v1082, %v1116
    %v1133 = vsel %vm1100, %v1083, %v1117
    %v1134 = vsel %vm1101, %v1084, %v1118
    %v1135 = vsel %vm1102, %v1085, %v1119
    %v1136 = vsel %vm1103, %v1086, %v1120
    %v1137 = vsel %vm1104, %v1087, %v1121
    %v1138 = vsel %vm1105, %v1088, %v1122
    %1139 = vst [vmem:[#allocation12] sm:$0xff] %v1123
    %1140 = vst [vmem:[#allocation12 + $0x8] sm:$0xff] %v1124
    %1141 = vst [vmem:[#allocation12 + $0x10] sm:$0xff] %v1125
    %1142 = vst [vmem:[#allocation12 + $0x18] sm:$0xff] %v1126
    %1143 = vst [vmem:[#allocation12 + $0x20] sm:$0xff] %v1127
    %1144 = vst [vmem:[#allocation12 + $0x28] sm:$0xff] %v1128
    %1145 = vst [vmem:[#allocation12 + $0x30] sm:$0xff] %v1129
    %1146 = vst [vmem:[#allocation12 + $0x38] sm:$0xff] %v1130
    %1147 = vst [vmem:[#allocation12 + $0x40] sm:$0xff] %v1131
    %1148 = vst [vmem:[#allocation12 + $0x48] sm:$0xff] %v1132
    %1149 = vst [vmem:[#allocation12 + $0x50] sm:$0xff] %v1133
    %1150 = vst [vmem:[#allocation12 + $0x58] sm:$0xff] %v1134
    %1151 = vst [vmem:[#allocation12 + $0x60] sm:$0xff] %v1135
    %1152 = vst [vmem:[#allocation12 + $0x68] sm:$0xff] %v1136
    %1153 = vst [vmem:[#allocation12 + $0x70] sm:$0xff] %v1137
    %1154 = vst [vmem:[#allocation12 + $0x78] sm:$0xff] %v1138
    // Predicated region
    $region50: #{tpu_custom_call.1} parent=1 // pred_check
      _
    $region51: #{tpu_custom_call.1} parent=1 // pred_check_branch
      %1156 = sbr.rel (0) target = $region53
    $region52: #{tpu_custom_call.1} parent=1 // pred_region
      %s1158 = ssub.s32 2048, 2048
      %1159 = vsyncadd [#allocation4], %s1158
      %s1160 = sshll.u32 [#allocation12], 4
      %s1161 = int_to_ptr.vmem [resolvable:$true] %s1160
      %1166 = dma.vmem_to_hbm [thread:$0]  %s1161, 2048, %s7, [#allocation4], 128, 128, 8
    $region53: #{tpu_custom_call.1} parent=1 // pred_fallthru
      _
    // Predicated region
    $region54: #{tpu_custom_call.1} parent=1 // pred_check
      _
    $region55: #{tpu_custom_call.1} parent=1 // pred_check_branch
      %1168 = sbr.rel (0) target = $region57
    $region56: #{tpu_custom_call.1} parent=1 // pred_region
      %1169 = dma.done [#allocation4], 2048
    $region57: #{tpu_custom_call.1} parent=1 // pred_fallthru
      _
    %1170 = vsyncpa [#allocation3], 1
    %1171 = vsyncpa [#allocation7], 1
    %1172 = vsyncpa [#allocation10], 1
    %1173 = vsyncpa [#allocation4], 1
    %1174 = vsyncpa [#allocation5], 1

</llo_original>
